<compile_context>
chip_gen: v7x
topology: tpu7x:2x2x1
jax: 0.10.0
libtpu: 0.0.40
codegen_flags: <defaults>
</compile_context>

<pallas_src>
import functools

import jax
import jax.numpy as jnp
from jax.experimental import pallas as pl
from jax.experimental.pallas import tpu as pltpu


def _soft_nll_kernel(pred_ref, target_ref, out_ref, *, tb, tc, n_rows, n_cols,
                     need_row_mask, need_col_mask):
    """Writes per-tile partial sums of target * log(pred) as a (1, 8, tc) block."""
    p = pred_ref[...].astype(jnp.float32)
    t = target_ref[...].astype(jnp.float32)
    e = t * jnp.log(p)  # negation folded out of the hot loop

    # Mask out-of-bounds rows/cols of a partial edge tile. Flags are static
    # Python bools, so evenly tiled inputs emit no masking code at all.
    if need_row_mask or need_col_mask:
        mask = None
        if need_row_mask:
            rows = (jax.lax.broadcasted_iota(jnp.int32, e.shape, 0)
                    + pl.program_id(0) * tb)
            mask = rows < n_rows
        if need_col_mask:
            cols = (jax.lax.broadcasted_iota(jnp.int32, e.shape, 1)
                    + pl.program_id(1) * tc)
            cmask = cols < n_cols
            mask = cmask if mask is None else (mask & cmask)
        e = jnp.where(mask, e, 0.0)

    # (tb, tc) -> (tb//8, 8, tc) and sum along the leading axis: pure vreg
    # adds on the VPU (no cross-lane XLU traffic in the hot loop).
    partial = jnp.sum(e.reshape(tb // 8, 8, tc), axis=0)
    out_ref[...] = partial.reshape(1, 8, tc)


def soft_nll_loss(pred, target, *, target_block_bytes=2 << 20,
                  max_class_tile=2048):
    """Pallas implementation of Soft_NLL_Loss(dim=-1).forward(pred, target)."""
    assert pred.shape == target.shape
    c = pred.shape[-1]
    pred2d = pred.reshape(-1, c)
    target2d = target.reshape(-1, c)
    r_orig = pred2d.shape[0]

    # Pad tiny row counts up to one sublane group (8) so the row tile is always
    # a multiple of 8. Padded rows contribute exactly 0 (0 * log(1)).
    r = r_orig
    if r < 8:
        pad = 8 - r
        pred2d = jnp.pad(pred2d, ((0, pad), (0, 0)), constant_values=1.0)
        target2d = jnp.pad(target2d, ((0, pad), (0, 0)), constant_values=0.0)
        r = 8

    # Class-axis (lane) tiling: only tile when C is vocab-scale.
    if c <= max_class_tile:
        tc, nct = c, 1
    else:
        tc = max_class_tile            # multiple of 128 keeps lanes dense
        nct = -(-c // tc)
    need_col_mask = (nct > 1) and (c % tc != 0)

    # Row tile: ~target_block_bytes per input block, multiple of 8, <= rows.
    itemsize = max(jnp.dtype(pred2d.dtype).itemsize,
                   jnp.dtype(target2d.dtype).itemsize)
    tb = max(8, (target_block_bytes // (tc * itemsize)) // 8 * 8)
    tb = min(tb, (r // 8) * 8)
    nrt = -(-r // tb)
    need_row_mask = (r % tb) != 0

    kernel = functools.partial(
        _soft_nll_kernel, tb=tb, tc=tc, n_rows=r, n_cols=c,
        need_row_mask=need_row_mask, need_col_mask=need_col_mask)

    partials = pl.pallas_call(
        kernel,
        out_shape=jax.ShapeDtypeStruct((nrt, 8, nct * tc), jnp.float32),
        grid_spec=pltpu.PrefetchScalarGridSpec(
            num_scalar_prefetch=0,
            grid=(nrt, nct),
            in_specs=[
                pl.BlockSpec((tb, tc), lambda i, j: (i, j)),
                pl.BlockSpec((tb, tc), lambda i, j: (i, j)),
            ],
            out_specs=pl.BlockSpec((1, 8, tc), lambda i, j: (i, 0, j)),
        ),
        compiler_params=pltpu.CompilerParams(
            dimension_semantics=("parallel", "parallel"),
            vmem_limit_bytes=32 * 1024 * 1024,
        ),
        cost_estimate=pl.CostEstimate(
            flops=2 * r * c,
            transcendentals=r * c,
            bytes_accessed=2 * r * c * itemsize + nrt * 8 * nct * tc * 4,
        ),
    )(pred2d, target2d)

    # Single final cross-lane reduction + negation + mean (original row count).
    return -jnp.sum(partials) / jnp.float32(r_orig)


if __name__ == "__main__":
    key = jax.random.PRNGKey(0)
    k1, k2 = jax.random.split(key)

    # Small, module-consistent shapes: batch=16 rows, 128 classes.
    B, C = 16, 128
    pred_logits = jax.random.normal(k1, (B, C), dtype=jnp.float32)
    target_logits = jax.random.normal(k2, (B, C), dtype=jnp.float32)
    pred = jax.nn.softmax(pred_logits, axis=-1)      # strictly positive for log
    target = jax.nn.softmax(target_logits, axis=-1)  # soft labels

    loss = soft_nll_loss(pred, target)
    loss = jax.block_until_ready(loss)

    # Reference check (plain JAX, same math as the PyTorch module).
    ref = jnp.mean(jnp.sum(-target * jnp.log(pred), axis=-1))
    assert jnp.allclose(loss, ref, rtol=1e-5, atol=1e-5), (loss, ref)

    print("KERNEL_OK")
</pallas_src>

<mosaic_0001>
module attributes {stable_mosaic.version = 11 : i64} {
  func.func @_soft_nll_kernel(%arg0: i32, %arg1: i32, %arg2: memref<16x128xf32, #tpu.memory_space<vmem>>, %arg3: memref<16x128xf32, #tpu.memory_space<vmem>>, %arg4: memref<1x8x128xf32, #tpu.memory_space<vmem>>) attributes {dimension_semantics = [#tpu.dimension_semantics<parallel>, #tpu.dimension_semantics<parallel>], iteration_bounds = array<i64: 1, 1>, scalar_prefetch = 0 : i64, scratch_operands = 0 : i64, tpu.core_type = #tpu.core_type<tc>, window_params = [{transform_indices = @transform_0, window_bounds = array<i64: 16, 128>}, {transform_indices = @transform_1, window_bounds = array<i64: 16, 128>}, {transform_indices = @transform_2, window_bounds = array<i64: 1, 8, 128>}]} {
    %c0 = arith.constant 0 : index
    %c0_0 = arith.constant 0 : index
    %0 = vector.load %arg2[%c0, %c0_0] : memref<16x128xf32, #tpu.memory_space<vmem>>, vector<16x128xf32>
    %c0_1 = arith.constant 0 : index
    %c0_2 = arith.constant 0 : index
    %1 = vector.load %arg3[%c0_1, %c0_2] : memref<16x128xf32, #tpu.memory_space<vmem>>, vector<16x128xf32>
    %2 = math.log %0 : vector<16x128xf32>
    %3 = arith.mulf %1, %2 : vector<16x128xf32>
    %4 = vector.shape_cast %3 : vector<16x128xf32> to vector<2x8x128xf32>
    %cst = arith.constant dense<0.000000e+00> : vector<8x128xf32>
    %5 = vector.multi_reduction <add>, %4, %cst [0] : vector<2x8x128xf32> to vector<8x128xf32>
    %6 = vector.shape_cast %5 : vector<8x128xf32> to vector<1x8x128xf32>
    %c0_3 = arith.constant 0 : index
    %c0_4 = arith.constant 0 : index
    %c0_5 = arith.constant 0 : index
    %7 = vector.load %arg4[%c0_3, %c0_4, %c0_5] : memref<1x8x128xf32, #tpu.memory_space<vmem>>, vector<1x8x128xf32>
    tpu.vector_store %arg4[%c0_3, %c0_4, %c0_5], %6 {strides = array<i32>} : memref<1x8x128xf32, #tpu.memory_space<vmem>>, vector<1x8x128xf32>,
    return
  }
  func.func @transform_0(%arg0: i32, %arg1: i32) -> (i32, i32) {
    %c0_i32 = arith.constant 0 : i32
    return %arg0, %arg1 : i32, i32
  }
  func.func @transform_1(%arg0: i32, %arg1: i32) -> (i32, i32) {
    %c0_i32 = arith.constant 0 : i32
    return %arg0, %arg1 : i32, i32
  }
  func.func @transform_2(%arg0: i32, %arg1: i32) -> (i32, i32, i32) {
    %c0_i32 = arith.constant 0 : i32
    %c0_i32_0 = arith.constant 0 : i32
    return %arg0, %c0_i32, %arg1 : i32, i32, i32
  }
}

</mosaic_0001>

<llo_original>
// kernel: tpu_custom_call.1
$region0: #{tpu_custom_call.1}
  #allocation0 [shape = 'u32[]', space=smem, size = 0x4, offset = 0x4, fixed_abs, tag = 'smem constant byte address 0x4 - core index']
  #allocation1 [shape = 'u32[144,128]{1,0:T(1,128)}', space=vmem, size = 0x12000, scoped, tag = 'internal scratch']
  %s0 = inlined_call_operand.hbm [shape: f32[16,128], index: 0, kind: input, shape index: {}]
  %s1 = inlined_call_operand.hbm [shape: f32[16,128], index: 1, kind: input, shape index: {}]
  %s2 = inlined_call_operand.hbm [shape: f32[1,8,128], index: 2, kind: output, shape index: {}]
  %s3 = sld [smem:[#allocation0]]
  $region26: #{tpu_custom_call.1} parent=0
    _
  %s5 = ssub.s32 1, %s3
  %s6 = scalar_select 0, %s5, %s3
  $region1: #{tpu_custom_call.1} parent=0
    #allocation2 [shape = 'u8[8192]{0}', space=vmem, size = 0x2000, scoped, tag = 'input window, operand 0, single buffered']
    #allocation3 [shape = 's32[1]{0}', space=sflag, size = 0x4, scoped, tag = 'scoped memory for tpu_custom_call.1']
    #allocation4 [shape = 's32[1]{0}', space=sflag, size = 0x4, scoped, tag = 'scoped memory for tpu_custom_call.1']
    #allocation5 [shape = 'u8[8192]{0}', space=vmem, size = 0x2000, scoped, tag = 'input window, operand 1, single buffered']
    #allocation6 [shape = 's32[1]{0}', space=sflag, size = 0x4, scoped, tag = 'scoped memory for tpu_custom_call.1']
    #allocation7 [shape = 'u8[4096]{0}', space=vmem, size = 0x1000, scoped, tag = 'output window, operand 0, single buffered']
    %7 = vsyncpa [#allocation3], 0
    %8 = vsyncpa [#allocation6], 0
    %9 = vsyncpa [#allocation4], 0
    // Predicated region
    $region2: #{tpu_custom_call.1} parent=1 // pred_check
      _
    $region3: #{tpu_custom_call.1} parent=1 // pred_check_branch
      %11 = sbr.rel (0) target = $region5
    $region4: #{tpu_custom_call.1} parent=1 // pred_region
      %s13 = ssub.s32 256, 256
      %14 = vsyncadd [#allocation3], %s13
      %s15 = sshll.u32 [#allocation2], 4
      %s16 = int_to_ptr.vmem [resolvable:$true] %s15
      %21 = dma.hbm_to_vmem [thread:$0]  %s0, 256, %s16, [#allocation3], 128, 128, 8
    $region5: #{tpu_custom_call.1} parent=1 // pred_fallthru
      _
    // Predicated region
    $region6: #{tpu_custom_call.1} parent=1 // pred_check
      _
    $region7: #{tpu_custom_call.1} parent=1 // pred_check_branch
      %23 = sbr.rel (0) target = $region9
    $region8: #{tpu_custom_call.1} parent=1 // pred_region
      %s25 = ssub.s32 256, 256
      %26 = vsyncadd [#allocation6], %s25
      %s27 = sshll.u32 [#allocation5], 4
      %s28 = int_to_ptr.vmem [resolvable:$true] %s27
      %33 = dma.hbm_to_vmem [thread:$0]  %s1, 256, %s28, [#allocation6], 128, 128, 8
    $region9: #{tpu_custom_call.1} parent=1 // pred_fallthru
      _
    // Predicated region
    $region10: #{tpu_custom_call.1} parent=1 // pred_check
      _
    $region11: #{tpu_custom_call.1} parent=1 // pred_check_branch
      %35 = sbr.rel (0) target = $region13
    $region12: #{tpu_custom_call.1} parent=1 // pred_region
      %36 = dma.done [#allocation3], 256
    $region13: #{tpu_custom_call.1} parent=1 // pred_fallthru
      _
    // Predicated region
    $region14: #{tpu_custom_call.1} parent=1 // pred_check
      _
    $region15: #{tpu_custom_call.1} parent=1 // pred_check_branch
      %38 = sbr.rel (0) target = $region17
    $region16: #{tpu_custom_call.1} parent=1 // pred_region
      %39 = dma.done [#allocation6], 256
    $region17: #{tpu_custom_call.1} parent=1 // pred_fallthru
      _
    %v40 = vld [vmem:[#allocation2] sm:$0xff]
    %v41 = vld [vmem:[#allocation2 + $0x8] sm:$0xff]
    %v42 = vld [vmem:[#allocation5] sm:$0xff]
    %v43 = vld [vmem:[#allocation5 + $0x8] sm:$0xff]
    %v44 = vlog2.pop %v40
    %v45 = vmul.f32 %v44, 0.6931472
    %v46 = vlog2.pop %v41
    %v47 = vmul.f32 %v46, 0.6931472
    %v48 = vmul.f32 %v42, %v45
    %v49 = vmul.f32 %v43, %v47
    %v50 = vadd.f32 %v48, %v49
    %51 = vst [vmem:[#allocation7] sm:$0xff] %v50
    // Predicated region
    $region18: #{tpu_custom_call.1} parent=1 // pred_check
      _
    $region19: #{tpu_custom_call.1} parent=1 // pred_check_branch
      %53 = sbr.rel (0) target = $region21
    $region20: #{tpu_custom_call.1} parent=1 // pred_region
      %s55 = ssub.s32 128, 128
      %56 = vsyncadd [#allocation4], %s55
      %s58 = sshll.u32 [#allocation7], 4
      %s59 = int_to_ptr.vmem [resolvable:$true] %s58
      %61 = dma.vmem_to_hbm [thread:$0]  %s59, 128, %s2, [#allocation4]
    $region21: #{tpu_custom_call.1} parent=1 // pred_fallthru
      _
    // Predicated region
    $region22: #{tpu_custom_call.1} parent=1 // pred_check
      _
    $region23: #{tpu_custom_call.1} parent=1 // pred_check_branch
      %63 = sbr.rel (0) target = $region25
    $region24: #{tpu_custom_call.1} parent=1 // pred_region
      %64 = dma.done [#allocation4], 128
    $region25: #{tpu_custom_call.1} parent=1 // pred_fallthru
      _
    %65 = vsyncpa [#allocation3], 1
    %66 = vsyncpa [#allocation6], 1
    %67 = vsyncpa [#allocation4], 1

</llo_original>
